<compile_context>
chip_gen: v5e
topology: v5e:2x2
jax: 0.10.0
libtpu: 0.0.40
codegen_flags: <defaults>
</compile_context>

<pallas_src>
import functools

import jax
import jax.numpy as jnp
from jax.experimental import pallas as pl
from jax.experimental.pallas import tpu as pltpu


def _round_up(x, m):
    return ((x + m - 1) // m) * m


def _pick_tile(dim, align, preferred):
    """Tile for `dim`: the full dim if it fits in `preferred` (a full-extent block is
    always layout-legal), else the largest `align`-multiple <= preferred dividing
    round_up(dim, align) evenly (partial last block otherwise, handled by Pallas)."""
    if dim <= preferred:
        return dim
    start = (preferred // align) * align
    dim_a = _round_up(dim, align)
    for cand in range(start, align - 1, -align):
        if dim_a % cand == 0:
            return cand
    return start


def _pick_divisor_tile(dim, align, preferred):
    """Largest `align`-multiple <= preferred dividing `dim` exactly, or None."""
    if dim % align != 0:
        return None
    start = min(preferred, dim)
    start -= start % align
    for cand in range(start, align - 1, -align):
        if dim % cand == 0:
            return cand
    return None


# ---------------------------------------------------------------------------
# Kernels
# ---------------------------------------------------------------------------

def _ffn_kernel(x_ref, w_ref, b_ref, o_ref, *, compute_dtype):
    # x_ref: (tm, K); w_ref: (K, tn); b_ref: (1, tn) f32; o_ref: (tm, tn)
    x = x_ref[...]
    if compute_dtype is not None and x.dtype != compute_dtype:
        x = x.astype(compute_dtype)      # VPU cast, overlapped with MXU work
    acc = jnp.dot(x, w_ref[...], preferred_element_type=jnp.float32)
    o_ref[...] = (acc + b_ref[...]).astype(o_ref.dtype)


def _ffn_kernel_ktiled(x_ref, w_ref, b_ref, o_ref, acc_ref, *, compute_dtype):
    # 3-D grid (M, N, K); K is the innermost reduction axis.
    k = pl.program_id(2)

    @pl.when(k == 0)
    def _():
        acc_ref[...] = jnp.zeros_like(acc_ref)

    x = x_ref[...]
    if compute_dtype is not None and x.dtype != compute_dtype:
        x = x.astype(compute_dtype)
    acc_ref[...] += jnp.dot(x, w_ref[...], preferred_element_type=jnp.float32)

    @pl.when(k == pl.num_programs(2) - 1)
    def _():
        o_ref[...] = (acc_ref[...] + b_ref[...]).astype(o_ref.dtype)


# ---------------------------------------------------------------------------
# Wrapper
# ---------------------------------------------------------------------------

def naive_ffn_forward(x, weight, bias, *, n_head, n_input, n_hidden,
                      tm=256, tn=512, tk=512, compute_dtype=None,
                      max_vmem_bytes=None):
    """Forward of NaiveFeedForwardNeuralNetwork.

    x:      [n_batch, n_seq, n_input]
    weight: [n_input, n_head*n_hidden]   (transposed vs. torch's [out, in])
    bias:   [n_head*n_hidden]
    Returns [n_batch, n_seq, n_head*n_hidden].
    `max_vmem_bytes` only overrides the path/tile selection budget (testing hook).
    """
    n_batch, n_seq, f = x.shape
    assert f == n_input, "Linear expects last dim == n_input"
    M = n_batch * n_seq
    K = n_input
    N = n_head * n_hidden
    out_dtype = x.dtype

    # Activations keep their dtype (bf16 cast happens in-kernel -> no extra HBM pass);
    # the weight is cast once here (it may be re-read per M tile, so it amortizes).
    x2 = x.reshape(M, K)                                  # free row-major view
    w2 = weight if compute_dtype is None else weight.astype(compute_dtype)
    b2 = bias.astype(jnp.float32).reshape(1, N)

    x_isz = jnp.dtype(x2.dtype).itemsize
    w_isz = jnp.dtype(w2.dtype).itemsize
    o_isz = jnp.dtype(out_dtype).itemsize

    # Per-generation VMEM budget: ~20% headroom on v7x (64 MiB part), cap at 112 MiB
    # on the 128 MiB parts (v5e/v6e) so the compiler keeps scratch room.
    try:
        vmem_cap = int(pltpu.get_tpu_info().vmem_capacity_bytes)
    except Exception:                                     # pragma: no cover
        vmem_cap = 64 * 1024 * 1024
    vmem_budget = min(int(vmem_cap * 0.80), 112 * 1024 * 1024)
    path_budget = vmem_budget if max_vmem_bytes is None else int(max_vmem_bytes)

    # Tile selection: lane-dense N tiles (128-multiples), M tiles aligned to the
    # native sublane packing (16 for bf16 compute, 8 otherwise).
    m_align = 8
    if compute_dtype is not None and jnp.dtype(compute_dtype).itemsize < 4:
        m_align = 32 // jnp.dtype(compute_dtype).itemsize   # bf16 -> 16
    tm_eff = _pick_tile(M, m_align, tm)
    tn_eff = _pick_tile(N, 128, tn)

    flops = 2 * M * K * N

    def _call(kernel, grid, in_specs, out_specs, scratch_shapes, dim_sem,
              footprint, bytes_accessed):
        # Never set the limit below the 32 MiB compiler default: a too-small limit is a
        # compile failure, while headroom above the computed footprint is free.
        vmem_limit = int(min(vmem_budget, max(footprint * 3 // 2, 32 * 1024 * 1024)))
        return pl.pallas_call(
            functools.partial(kernel, compute_dtype=compute_dtype),
            out_shape=jax.ShapeDtypeStruct((M, N), out_dtype),
            grid_spec=pltpu.PrefetchScalarGridSpec(
                num_scalar_prefetch=0,
                grid=grid,
                in_specs=in_specs,
                out_specs=out_specs,
                scratch_shapes=scratch_shapes,
            ),
            compiler_params=pltpu.CompilerParams(
                dimension_semantics=dim_sem,
                vmem_limit_bytes=vmem_limit,
            ),
            cost_estimate=pl.CostEstimate(
                flops=int(flops), transcendentals=0,
                bytes_accessed=int(bytes_accessed)),
        )(x2, w2, b2)

    # -----------------------------------------------------------------------
    # Path 1: weight-resident. 1-D grid over M; W/bias index maps are constant,
    # so they are DMA'd once and stay in VMEM while activations/outputs stream.
    # Footprint conservatively counts 2 buffers per operand (default pipelining).
    # -----------------------------------------------------------------------
    resident_bytes = (2 * K * N * w_isz + 2 * N * 4
                      + 2 * tm_eff * K * x_isz + 2 * tm_eff * N * o_isz)
    if resident_bytes <= path_budget:
        grid = (pl.cdiv(M, tm_eff),)
        out = _call(
            _ffn_kernel, grid,
            in_specs=[
                pl.BlockSpec((tm_eff, K), lambda i: (i, 0)),   # activations stream
                pl.BlockSpec((K, N), lambda i: (0, 0)),        # weight stays resident
                pl.BlockSpec((1, N), lambda i: (0, 0)),        # bias stays resident (f32)
            ],
            out_specs=pl.BlockSpec((tm_eff, N), lambda i: (i, 0)),
            scratch_shapes=[],
            dim_sem=("parallel",),                             # shard M across v7x TCs
            footprint=resident_bytes,
            bytes_accessed=M * K * x_isz + K * N * w_isz + N * 4 + M * N * o_isz,
        )
        return out.reshape(n_batch, n_seq, N)

    # -----------------------------------------------------------------------
    # Decide whether K needs tiling (3-D matmul with f32 VMEM accumulator).
    # Only tile K when tk divides K exactly so the reduction never touches
    # out-of-bounds (garbage) K rows/cols of a partial block.
    # -----------------------------------------------------------------------
    def k_resident_bytes(tm_c, tn_c):
        return (2 * tm_c * K * x_isz + 2 * K * tn_c * w_isz
                + 2 * tn_c * 4 + 2 * tm_c * tn_c * o_isz)

    tk_eff = None
    if k_resident_bytes(tm_eff, tn_eff) > path_budget // 2:
        cand = _pick_divisor_tile(K, 128, tk)
        while cand is not None and cand < K:
            fp = (2 * tm_eff * cand * x_isz + 2 * cand * tn_eff * w_isz
                  + 2 * tn_eff * 4 + 2 * tm_eff * tn_eff * o_isz
                  + tm_eff * tn_eff * 4)
            if fp <= path_budget or cand <= 128:
                tk_eff = cand
                break
            cand = _pick_divisor_tile(K, 128, cand - 128)

    if tk_eff is not None:
        # Path 3: 3-D grid (M, N, K); reduction axis last ("arbitrary"); f32
        # accumulator in VMEM; bias add + downcast on the final K step.
        grid = (pl.cdiv(M, tm_eff), pl.cdiv(N, tn_eff), K // tk_eff)
        grid_m, grid_n = grid[0], grid[1]
        footprint = (2 * tm_eff * tk_eff * x_isz + 2 * tk_eff * tn_eff * w_isz
                     + 2 * tn_eff * 4 + 2 * tm_eff * tn_eff * o_isz
                     + tm_eff * tn_eff * 4)
        out = _call(
            _ffn_kernel_ktiled, grid,
            in_specs=[
                pl.BlockSpec((tm_eff, tk_eff), lambda i, j, k: (i, k)),
                pl.BlockSpec((tk_eff, tn_eff), lambda i, j, k: (k, j)),
                pl.BlockSpec((1, tn_eff), lambda i, j, k: (0, j)),
            ],
            out_specs=pl.BlockSpec((tm_eff, tn_eff), lambda i, j, k: (i, j)),
            scratch_shapes=[pltpu.VMEM((tm_eff, tn_eff), jnp.float32)],
            dim_sem=("parallel", "parallel", "arbitrary"),
            footprint=footprint,
            bytes_accessed=(grid_n * M * K * x_isz + grid_m * K * N * w_isz
                            + grid_m * N * 4 + M * N * o_isz),
        )
        return out.reshape(n_batch, n_seq, N)

    # -----------------------------------------------------------------------
    # Path 2: 2-D grid (M outer, N inner), full K resident per block.  The x
    # block index is constant across the inner N sweep (fetched once per M
    # tile); the weight tile streams double-buffered behind MXU work.  Shrink
    # tn, then tm, if the double-buffered blocks don't fit the budget.
    # TODO(synk): if K is huge and not a multiple of 128 (so K-tiling is not
    # exact), a masked K-tail path would be needed; unhandled edge case here.
    # -----------------------------------------------------------------------
    while k_resident_bytes(tm_eff, tn_eff) > path_budget and tn_eff > 128:
        tn_eff = max(128, _round_up(tn_eff // 2, 128))
    while k_resident_bytes(tm_eff, tn_eff) > path_budget and tm_eff > m_align:
        tm_eff = max(m_align, _round_up(tm_eff // 2, m_align))

    grid = (pl.cdiv(M, tm_eff), pl.cdiv(N, tn_eff))
    grid_m = grid[0]
    out = _call(
        _ffn_kernel, grid,
        in_specs=[
            pl.BlockSpec((tm_eff, K), lambda i, j: (i, 0)),
            pl.BlockSpec((K, tn_eff), lambda i, j: (0, j)),
            pl.BlockSpec((1, tn_eff), lambda i, j: (0, j)),
        ],
        out_specs=pl.BlockSpec((tm_eff, tn_eff), lambda i, j: (i, j)),
        scratch_shapes=[],
        dim_sem=("parallel", "parallel"),
        footprint=k_resident_bytes(tm_eff, tn_eff),
        bytes_accessed=(M * K * x_isz + grid_m * K * N * w_isz
                        + grid_m * N * 4 + M * N * o_isz),
    )
    return out.reshape(n_batch, n_seq, N)


# ---------------------------------------------------------------------------
# Self-test
# ---------------------------------------------------------------------------

if __name__ == "__main__":
    def make_uniform_inputs(key, n_head, n_input, n_hidden, n_batch, n_seq):
        kx, kw, kb = jax.random.split(key, 3)
        bound = 1.0 / (n_input ** 0.5)
        weight = jax.random.uniform(kw, (n_input, n_head * n_hidden),
                                    minval=-bound, maxval=bound, dtype=jnp.float32)
        bias = jax.random.uniform(kb, (n_head * n_hidden,),
                                  minval=-bound, maxval=bound, dtype=jnp.float32)
        x = jax.random.normal(kx, (n_batch, n_seq, n_input), dtype=jnp.float32)
        return x, weight, bias

    # --- small, shape-consistent config (n_head=1 so the torch forward is valid) ---
    n_head, n_input, n_hidden = 1, 32, 32
    n_batch, n_seq = 2, 8
    x, w, b = make_uniform_inputs(jax.random.PRNGKey(0), n_head, n_input, n_hidden,
                                  n_batch, n_seq)
    ref = (x.reshape(-1, n_input) @ w + b).reshape(n_batch, n_seq, n_head * n_hidden)

    # f32 path (exact semantics of the torch module); weight-resident path 1.
    out = jax.block_until_ready(naive_ffn_forward(
        x, w, b, n_head=n_head, n_input=n_input, n_hidden=n_hidden))
    assert out.shape == (n_batch, n_seq, n_head * n_hidden)
    assert jnp.allclose(out, ref, atol=1e-5, rtol=1e-5)

    # bf16 compute path (weight cast once in the wrapper, x cast in-kernel).
    out_bf16 = jax.block_until_ready(naive_ffn_forward(
        x, w, b, n_head=n_head, n_input=n_input, n_hidden=n_hidden,
        compute_dtype=jnp.bfloat16))
    assert jnp.allclose(out_bf16, ref, atol=5e-2, rtol=5e-2)

    # --- exercise the 2-D (K-resident) and 3-D (K-tiled accumulator) paths at small
    #     shapes by shrinking the path-selection budget. Integer-valued inputs make
    #     both the kernel and the jnp reference bit-exact regardless of MXU precision.
    kh = jax.random.PRNGKey(1)
    k1, k2, k3 = jax.random.split(kh, 3)
    n_head2, n_input2, n_hidden2 = 1, 256, 384
    n_batch2, n_seq2 = 2, 64
    N2 = n_head2 * n_hidden2
    x2 = jax.random.randint(k1, (n_batch2, n_seq2, n_input2), -4, 5).astype(jnp.float32)
    w2 = jax.random.randint(k2, (n_input2, N2), -2, 3).astype(jnp.float32)
    b2 = jax.random.randint(k3, (N2,), -3, 4).astype(jnp.float32)
    ref2 = (x2.reshape(-1, n_input2) @ w2 + b2).reshape(n_batch2, n_seq2, N2)

    out_2d = jax.block_until_ready(naive_ffn_forward(
        x2, w2, b2, n_head=n_head2, n_input=n_input2, n_hidden=n_hidden2,
        max_vmem_bytes=1 << 20))            # forces the 2-D (M, N) grid path
    assert jnp.allclose(out_2d, ref2, atol=1e-5, rtol=1e-5)

    out_3d = jax.block_until_ready(naive_ffn_forward(
        x2, w2, b2, n_head=n_head2, n_input=n_input2, n_hidden=n_hidden2,
        tk=128, max_vmem_bytes=1 << 20))    # forces the K-tiled accumulator path
    assert jnp.allclose(out_3d, ref2, atol=1e-5, rtol=1e-5)

    print("KERNEL_OK")
</pallas_src>

<mosaic_0001>
module attributes {stable_mosaic.version = 11 : i64} {
  func.func @_ffn_kernel(%arg0: i32, %arg1: memref<16x32xf32, #tpu.memory_space<vmem>>, %arg2: memref<32x32xf32, #tpu.memory_space<vmem>>, %arg3: memref<1x32xf32, #tpu.memory_space<vmem>>, %arg4: memref<16x32xf32, #tpu.memory_space<vmem>>) attributes {dimension_semantics = [#tpu.dimension_semantics<parallel>], iteration_bounds = array<i64: 1>, scalar_prefetch = 0 : i64, scratch_operands = 0 : i64, tpu.core_type = #tpu.core_type<tc>, window_params = [{transform_indices = @transform_0, window_bounds = array<i64: 16, 32>}, {pipeline_mode = #tpu.pipeline_mode<synchronous>, transform_indices = @transform_1, window_bounds = array<i64: 32, 32>}, {pipeline_mode = #tpu.pipeline_mode<synchronous>, transform_indices = @transform_2, window_bounds = array<i64: 1, 32>}, {transform_indices = @transform_3, window_bounds = array<i64: 16, 32>}]} {
    %c0 = arith.constant 0 : index
    %c0_0 = arith.constant 0 : index
    %0 = vector.load %arg1[%c0, %c0_0] : memref<16x32xf32, #tpu.memory_space<vmem>>, vector<16x32xf32>
    %c0_1 = arith.constant 0 : index
    %c0_2 = arith.constant 0 : index
    %1 = vector.load %arg2[%c0_1, %c0_2] : memref<32x32xf32, #tpu.memory_space<vmem>>, vector<32x32xf32>
    %cst = arith.constant dense<0.000000e+00> : vector<16x32xf32>
    %2 = tpu.matmul %0, %1, %cst {dimension_numbers = #tpu.dot_dimension_numbers<[1], [0], [0], [1], [0, 0, 1, 1], [], []>} : vector<16x32xf32>, vector<32x32xf32>, vector<16x32xf32> -> vector<16x32xf32>
    %c0_3 = arith.constant 0 : index
    %c0_4 = arith.constant 0 : index
    %3 = vector.load %arg3[%c0_3, %c0_4] : memref<1x32xf32, #tpu.memory_space<vmem>>, vector<1x32xf32>
    %4 = vector.broadcast %3 : vector<1x32xf32> to vector<16x32xf32>
    %5 = arith.addf %2, %4 : vector<16x32xf32>
    %c0_5 = arith.constant 0 : index
    %c0_6 = arith.constant 0 : index
    %6 = vector.load %arg4[%c0_5, %c0_6] : memref<16x32xf32, #tpu.memory_space<vmem>>, vector<16x32xf32>
    tpu.vector_store %arg4[%c0_5, %c0_6], %5 {strides = array<i32>} : memref<16x32xf32, #tpu.memory_space<vmem>>, vector<16x32xf32>,
    return
  }
  func.func @transform_0(%arg0: i32) -> (i32, i32) {
    %c0_i32 = arith.constant 0 : i32
    %c0_i32_0 = arith.constant 0 : i32
    return %arg0, %c0_i32 : i32, i32
  }
  func.func @transform_1(%arg0: i32) -> (i32, i32) {
    %c0_i32 = arith.constant 0 : i32
    %c0_i32_0 = arith.constant 0 : i32
    %c0_i32_1 = arith.constant 0 : i32
    return %c0_i32, %c0_i32_0 : i32, i32
  }
  func.func @transform_2(%arg0: i32) -> (i32, i32) {
    %c0_i32 = arith.constant 0 : i32
    %c0_i32_0 = arith.constant 0 : i32
    %c0_i32_1 = arith.constant 0 : i32
    return %c0_i32, %c0_i32_0 : i32, i32
  }
  func.func @transform_3(%arg0: i32) -> (i32, i32) {
    %c0_i32 = arith.constant 0 : i32
    %c0_i32_0 = arith.constant 0 : i32
    return %arg0, %c0_i32 : i32, i32
  }
}

</mosaic_0001>

<llo_original>
// kernel: tpu_custom_call.1
$region0: #{tpu_custom_call.1}
  #allocation0 [shape = 'u32[]', space=smem, size = 0x4, offset = 0x4, fixed_abs, tag = 'smem constant byte address 0x4 - core index']
  #allocation1 [shape = 'u32[72,128]{1,0:T(1,128)}', space=vmem, size = 0x9000, scoped, tag = 'internal scratch']
  %s0 = inlined_call_operand.hbm [shape: f32[16,32], index: 0, kind: input, shape index: {}]
  %s1 = inlined_call_operand.hbm [shape: f32[32,32], index: 1, kind: input, shape index: {}]
  %s2 = inlined_call_operand.vmem [shape: f32[1,32], index: 2, kind: input, shape index: {}]
  %s3 = inlined_call_operand.hbm [shape: f32[16,32], index: 3, kind: output, shape index: {}]
  %s4 = sld [smem:[#allocation0]]
  $region30: #{tpu_custom_call.1} parent=0
    _
  %s6 = ssub.s32 1, %s4
  %s7 = scalar_select 0, %s6, %s4
  $region1: #{tpu_custom_call.1} parent=0
    #allocation2 [shape = 'u8[8192]{0}', space=vmem, size = 0x2000, scoped, tag = 'input window, operand 0, single buffered']
    #allocation3 [shape = 's32[1]{0}', space=sflag, size = 0x4, scoped, tag = 'scoped memory for tpu_custom_call.1']
    #allocation4 [shape = 's32[1]{0}', space=sflag, size = 0x4, scoped, tag = 'scoped memory for tpu_custom_call.1']
    #allocation5 [shape = 'u8[16384]{0}', space=vmem, size = 0x4000, scoped, tag = 'input window, operand 1, single buffered']
    #allocation6 [shape = 's32[1]{0}', space=sflag, size = 0x4, scoped, tag = 'scoped memory for tpu_custom_call.1']
    #allocation7 [shape = 'u8[8192]{0}', space=vmem, size = 0x2000, scoped, tag = 'output window, operand 0, single buffered']
    %8 = vsyncpa [#allocation3], 0
    %9 = vsyncpa [#allocation6], 0
    %10 = vsyncpa [#allocation4], 0
    // Predicated region
    $region2: #{tpu_custom_call.1} parent=1 // pred_check
      _
    $region3: #{tpu_custom_call.1} parent=1 // pred_check_branch
      %12 = sbr.rel (0) target = $region5
    $region4: #{tpu_custom_call.1} parent=1 // pred_region
      %14 = vsyncadd [#allocation3], 0
      %s15 = sshll.u32 %s0, 4
      %s16 = int_to_ptr.hbm [resolvable:$true] %s15
      %s17 = sshll.u32 [#allocation2], 4
      %s18 = int_to_ptr.vmem [resolvable:$true] %s17
      %23 = dma.hbm_to_vmem [thread:$0]  %s16, 256, %s18, [#allocation3], 128, 128, 8
    $region5: #{tpu_custom_call.1} parent=1 // pred_fallthru
      _
    // Predicated region
    $region6: #{tpu_custom_call.1} parent=1 // pred_check
      _
    $region7: #{tpu_custom_call.1} parent=1 // pred_check_branch
      %25 = sbr.rel (0) target = $region9
    $region8: #{tpu_custom_call.1} parent=1 // pred_region
      %27 = vsyncadd [#allocation6], 0
      %s28 = sshll.u32 %s1, 4
      %s29 = int_to_ptr.hbm [resolvable:$true] %s28
      %s30 = sshll.u32 [#allocation5], 4
      %s31 = int_to_ptr.vmem [resolvable:$true] %s30
      %36 = dma.hbm_to_vmem [thread:$0]  %s29, 512, %s31, [#allocation6], 128, 128, 8
    $region9: #{tpu_custom_call.1} parent=1 // pred_fallthru
      _
    // Predicated region
    $region10: #{tpu_custom_call.1} parent=1 // pred_check
      _
    $region11: #{tpu_custom_call.1} parent=1 // pred_check_branch
      %38 = sbr.rel (0) target = $region13
    $region12: #{tpu_custom_call.1} parent=1 // pred_region
      _
    $region13: #{tpu_custom_call.1} parent=1 // pred_fallthru
      _
    // Predicated region
    $region14: #{tpu_custom_call.1} parent=1 // pred_check
      _
    $region15: #{tpu_custom_call.1} parent=1 // pred_check_branch
      %40 = sbr.rel (0) target = $region17
    $region16: #{tpu_custom_call.1} parent=1 // pred_region
      %42 = dma.done [#allocation3], 256
    $region17: #{tpu_custom_call.1} parent=1 // pred_fallthru
      _
    // Predicated region
    $region18: #{tpu_custom_call.1} parent=1 // pred_check
      _
    $region19: #{tpu_custom_call.1} parent=1 // pred_check_branch
      %44 = sbr.rel (0) target = $region21
    $region20: #{tpu_custom_call.1} parent=1 // pred_region
      %46 = dma.done [#allocation6], 512
    $region21: #{tpu_custom_call.1} parent=1 // pred_fallthru
      _
    %v47 = vld [vmem:[#allocation2] sm:$0xff]
    %v48 = vld [vmem:[#allocation2 + $0x8] sm:$0xff]
    %v49 = vld [vmem:[#allocation5] sm:$0xff]
    %v50 = vld [vmem:[#allocation5 + $0x8] sm:$0xff]
    %v51 = vld [vmem:[#allocation5 + $0x10] sm:$0xff]
    %v52 = vld [vmem:[#allocation5 + $0x18] sm:$0xff]
    %v53 = vld [vmem:[%s2] sm:$0x1]
    %v55 = vperm.slane %v53, 0
    %vm57 = vcmask 261120
    %v59 = vsel %vm57, %v47, 0
    %v62 = vsel %vm57, %v48, 0
    %64 = vmatpush.msra.mxu0 0.0
    %65 = vmatpush.msra.mxu0 0.0
    %66 = vmatpush.msra.mxu0 0.0
    %67 = vmatpush.msra.mxu0 0.0
    %68 = vmatpush.msra.mxu0 0.0
    %69 = vmatpush.msra.mxu0 0.0
    %70 = vmatpush.msra.mxu0 0.0
    %71 = vmatpush.msra.mxu0 0.0
    %72 = vmatpush.msra.mxu0 0.0
    %73 = vmatpush.msra.mxu0 0.0
    %74 = vmatpush.msra.mxu0 0.0
    %75 = vmatpush.msra.mxu0 0.0
    %76 = vmatpush.msra.mxu0 %v52
    %77 = vmatpush.msra.mxu0 %v51
    %78 = vmatpush.msra.mxu0 %v50
    %79 = vmatpush.msra.mxu0 %v49
    %80 = vmatmul.f32.gmra.mxu0 %v59
    %v81 = vpop.f32.mrf.mxu0
    %v82 = vadd.f32 %v55, %v81
    %83 = vmatmul.f32.gmra.mxu0 %v62
    %v84 = vpop.f32.mrf.mxu0
    %v85 = vadd.f32 %v55, %v84
    %86 = vdwg.mxu0
    %87 = vst.msk [vmem:[#allocation7] sm:$0xff] %vm57, %v82
    %88 = vst.msk [vmem:[#allocation7 + $0x8] sm:$0xff] %vm57, %v85
    // Predicated region
    $region22: #{tpu_custom_call.1} parent=1 // pred_check
      _
    $region23: #{tpu_custom_call.1} parent=1 // pred_check_branch
      %90 = sbr.rel (0) target = $region25
    $region24: #{tpu_custom_call.1} parent=1 // pred_region
      %92 = vsyncadd [#allocation4], 0
      %s93 = sshll.u32 [#allocation7], 4
      %s94 = int_to_ptr.vmem [resolvable:$true] %s93
      %s95 = sshll.u32 %s3, 4
      %s96 = int_to_ptr.hbm [resolvable:$true] %s95
      %101 = dma.vmem_to_hbm [thread:$0]  %s94, 256, %s96, [#allocation4], 128, 128, 8
    $region25: #{tpu_custom_call.1} parent=1 // pred_fallthru
      _
    // Predicated region
    $region26: #{tpu_custom_call.1} parent=1 // pred_check
      _
    $region27: #{tpu_custom_call.1} parent=1 // pred_check_branch
      %103 = sbr.rel (0) target = $region29
    $region28: #{tpu_custom_call.1} parent=1 // pred_region
      %105 = dma.done [#allocation4], 256
    $region29: #{tpu_custom_call.1} parent=1 // pred_fallthru
      _
    %106 = vsyncpa [#allocation3], 1
    %107 = vsyncpa [#allocation6], 1
    %108 = vsyncpa [#allocation4], 1

</llo_original>
